<compile_context>
chip_gen: v7x
topology: tpu7x:2x2x1
jax: 0.10.0
libtpu: 0.0.40
codegen_flags: <defaults>
</compile_context>

<pallas_src>
import jax
import jax.numpy as jnp
from jax import lax
from jax.experimental import pallas as pl
from jax.experimental.pallas import tpu as pltpu

_LANE = 128


def _round_up(x: int, m: int) -> int:
    return ((x + m - 1) // m) * m


def _device_kind() -> str:
    try:
        return jax.devices()[0].device_kind.lower()
    except Exception:
        return ""


def _cores_per_chip() -> int:
    # Chips that expose two TensorCores to one program (megacore-style sharding of
    # "parallel" grid axes).  Best-effort string match; wrong guess only costs perf.
    kind = _device_kind()
    return 2 if any(tag in kind for tag in ("v4", "v5p", "v7")) else 1


def _vmem_tile_budget_bytes() -> int:
    # Exactly one pipelined input (output + scratch are tiny), so the VMEM footprint
    # is ~2x the input tile (double-buffered).  ~8 MiB/buffer sits on the flat part
    # of the measured HBM-roofline-vs-tile-size curve and, double-buffered, leaves
    # plenty of headroom even on v7x's 64 MiB physical VMEM.
    try:
        phys = pltpu.get_tpu_info().vmem_capacity_bytes
    except Exception:
        phys = 64 << 20  # assume the smallest (v7x) if the query is unavailable
    return min(8 << 20, max(2 << 20, phys // 8))


def _pick_tiles(batch: int, n: int, itemsize: int, cores: int, budget_bytes: int):
    sub = max(8, 32 // max(itemsize, 1))  # sublane quantum for packed dtypes
    b_pad = _round_up(batch, sub)

    # Batch tile: cap at 512 (keeps the lane-sparse (TB,1) accumulator RMW cheap);
    # with >=2 TensorCores, make sure the "parallel" axis gets at least two blocks.
    tb_cap = 512
    if cores > 1 and b_pad >= 2 * sub:
        tb_cap = min(tb_cap, _round_up(pl.cdiv(b_pad, cores), sub))
    if batch <= tb_cap:
        tb = batch                               # full-dim block (exempt from 8-align)
    else:
        tb = max(sub, (tb_cap // sub) * sub)

    # N tile: spend the remaining VMEM budget on the reduction axis, so small-batch /
    # large-vocab shapes collapse to one (or a few) reduction steps.
    budget_elems = budget_bytes // max(itemsize, 1)
    rows_padded = max(_round_up(tb, sub), sub)   # VMEM rows are sublane-padded
    tn_budget = max(_LANE, (budget_elems // rows_padded) // _LANE * _LANE)
    if n <= tn_budget:
        tn = n                                   # full-dim block (exempt from 128-align)
    else:
        tn = tn_budget
    return tb, tn


def _make_argmax_kernel(n_total: int, tn: int, compute_dtype, nan_aware: bool):
    """Row-wise argmax over the lane (last) axis, tiled over batch and N."""
    ragged = (n_total % tn) != 0

    def kernel(x_ref, o_ref, max_sc, idx_sc):
        k = pl.program_id(1)                  # N-tile index (reduction, innermost)
        last_k = pl.num_programs(1) - 1

        @pl.when(k == 0)
        def _():
            max_sc[...] = jnp.full(max_sc.shape, -jnp.inf, dtype=max_sc.dtype)
            idx_sc[...] = jnp.zeros(idx_sc.shape, dtype=idx_sc.dtype)

        # Load in native dtype; astype is a no-op in the common case (bf16 stays bf16
        # on chips with bf16 VALU, f32 stays f32).
        x = x_ref[...].astype(compute_dtype)  # (TB, TN)
        tb = x.shape[0]

        if nan_aware:
            # torch/jnp treat NaN as the maximum; map NaN -> +inf (first NaN wins).
            x = jnp.where(jnp.isnan(x), jnp.asarray(jnp.inf, dtype=x.dtype), x)

        # LOCAL column iota; the k*TN offset is added to the (TB,1) result AFTER the
        # min-reduction (saves a full-tile int add + compare per step).
        local_col = lax.broadcasted_iota(jnp.int32, (tb, tn), 1)

        def step(xv):
            tile_max = jnp.max(xv, axis=1, keepdims=True)                    # (TB,1)
            # FIRST local index achieving the max (min of masked iota).
            local_idx = jnp.min(
                jnp.where(xv == tile_max, local_col, jnp.int32(tn)),
                axis=1, keepdims=True)                                       # (TB,1)
            tile_idx = local_idx + k * tn
            tile_max32 = tile_max.astype(jnp.float32)   # exact for bf16 / f16
            run_max = max_sc[...]
            # STRICT ">" keeps the earliest index on cross-tile ties and leaves
            # idx_sc at 0 for all-(-inf)/all-NaN rows (matches argmax returning 0).
            better = tile_max32 > run_max
            max_sc[...] = jnp.where(better, tile_max32, run_max)
            idx_sc[...] = jnp.where(better, tile_idx, idx_sc[...])

        if ragged:
            # Padded columns exist only in the last N tile; gate the mask so the
            # steady state pays zero extra per-element work.
            @pl.when(k == last_k)
            def _():
                valid = n_total - k * tn
                step(jnp.where(local_col < valid,
                               x, jnp.asarray(-jnp.inf, dtype=x.dtype)))

            @pl.when(k != last_k)
            def _():
                step(x)
        else:
            step(x)

        @pl.when(k == last_k)
        def _():
            o_ref[...] = idx_sc[...]

    return kernel


def greedy(log_p: jax.Array, *, tb: int | None = None, tn: int | None = None,
           nan_aware: bool = False) -> jax.Array:
    """Equivalent of Greedy.forward: argmax over dim=1 (returned as int32)."""
    assert log_p.ndim == 2, "expected log_p of shape [B, N]"
    B, N = log_p.shape

    in_dtype = jnp.dtype(log_p.dtype)
    if not jnp.issubdtype(in_dtype, jnp.floating):
        log_p = log_p.astype(jnp.float32)
        in_dtype = jnp.dtype(jnp.float32)
    itemsize = in_dtype.itemsize

    # Compute dtype: argmax is order-based, so bf16 compares are exact -> stay in
    # bf16 on chips with a bf16 VPU (v6e/v7x); upcast on v5e and for other dtypes.
    kind = _device_kind()
    is_v5e = ("v5" in kind) and (("lite" in kind) or ("v5e" in kind))
    if in_dtype == jnp.float32:
        compute_dtype = jnp.float32
    elif in_dtype == jnp.bfloat16 and not is_v5e:
        compute_dtype = jnp.bfloat16
    else:
        compute_dtype = jnp.float32

    cores = _cores_per_chip()
    budget = _vmem_tile_budget_bytes()
    tb_d, tn_d = _pick_tiles(B, N, itemsize, cores, budget)
    TB = tb if tb is not None else tb_d
    TN = tn if tn is not None else tn_d

    grid = (pl.cdiv(B, TB), pl.cdiv(N, TN))

    # Explicit scoped-VMEM limit: one double-buffered input tile + slack.
    sub = max(8, 32 // max(itemsize, 1))
    tile_vmem = _round_up(TB, sub) * _round_up(TN, _LANE) * itemsize
    vmem_limit = min(2 * int(tile_vmem) + (4 << 20), 96 << 20)

    out = pl.pallas_call(
        _make_argmax_kernel(N, TN, compute_dtype, nan_aware),
        out_shape=jax.ShapeDtypeStruct((B, 1), jnp.int32),
        grid_spec=pltpu.PrefetchScalarGridSpec(
            num_scalar_prefetch=0,
            grid=grid,
            in_specs=[pl.BlockSpec((TB, TN), lambda i, k: (i, k))],
            out_specs=pl.BlockSpec((TB, 1), lambda i, k: (i, 0)),
            scratch_shapes=[
                pltpu.VMEM((TB, 1), jnp.float32),  # running max
                pltpu.VMEM((TB, 1), jnp.int32),    # running argmax
            ],
        ),
        compiler_params=pltpu.CompilerParams(
            dimension_semantics=("parallel", "arbitrary"),
            vmem_limit_bytes=vmem_limit,
        ),
        cost_estimate=pl.CostEstimate(
            flops=2 * B * N,
            transcendentals=0,
            bytes_accessed=B * N * itemsize + 4 * B,
        ),
    )(log_p)

    # TODO(synk): torch .long() is int64; TPU has no native 64-bit vector lanes, so we
    # return int32 — widen at the call site (with x64 enabled) only if truly required.
    return out[:, 0]


if __name__ == "__main__":
    key = jax.random.PRNGKey(0)
    k1, k2, k3, k4 = jax.random.split(key, 4)

    # Test 1: small, single-tile path (spec-like shape).
    B, N = 2, 16
    log_p = jax.random.normal(k1, (B, N), dtype=jnp.float32)
    result = greedy(log_p)
    jax.block_until_ready(result)
    expected = jnp.argmax(log_p, axis=1).astype(jnp.int32)
    assert result.shape == (B,)
    assert result.dtype == jnp.int32
    assert bool(jnp.all(result == expected))

    # Test 2: multi-tile reduction (even division), bf16 input, forced small tiles.
    B2, N2 = 16, 384
    lp2 = jax.random.normal(k2, (B2, N2), dtype=jnp.float32).astype(jnp.bfloat16)
    r2 = greedy(lp2, tb=8, tn=128)
    jax.block_until_ready(r2)
    e2 = jnp.argmax(lp2, axis=1).astype(jnp.int32)
    assert bool(jnp.all(r2 == e2))

    # Test 3: ragged tiles (TB does not divide B, TN does not divide N) —
    # exercises the gated last-tile column mask and padded-batch clipping.
    B3, N3 = 10, 200
    lp3 = jax.random.normal(k3, (B3, N3), dtype=jnp.float32)
    r3 = greedy(lp3, tb=8, tn=128)
    jax.block_until_ready(r3)
    e3 = jnp.argmax(lp3, axis=1).astype(jnp.int32)
    assert bool(jnp.all(r3 == e3))

    # Test 4: auto-tiled small-batch / wide-row ("greedy decode") shape class —
    # the tile picker should collapse this to a single reduction step.
    B4, N4 = 4, 1000
    lp4 = jax.random.normal(k4, (B4, N4), dtype=jnp.float32)
    r4 = greedy(lp4)
    jax.block_until_ready(r4)
    e4 = jnp.argmax(lp4, axis=1).astype(jnp.int32)
    assert bool(jnp.all(r4 == e4))

    print("KERNEL_OK")
</pallas_src>

<mosaic_0001>
module attributes {stable_mosaic.version = 11 : i64} {
  func.func @kernel(%arg0: i32, %arg1: i32, %arg2: memref<2x16xf32, #tpu.memory_space<vmem>>, %arg3: memref<2x1xi32, #tpu.memory_space<vmem>>, %arg4: memref<2x1xf32, #tpu.memory_space<vmem>>, %arg5: memref<2x1xi32, #tpu.memory_space<vmem>>) attributes {dimension_semantics = [#tpu.dimension_semantics<parallel>, #tpu.dimension_semantics<arbitrary>], iteration_bounds = array<i64: 1, 1>, scalar_prefetch = 0 : i64, scratch_operands = 2 : i64, tpu.core_type = #tpu.core_type<tc>, window_params = [{transform_indices = @transform_0, window_bounds = array<i64: 2, 16>}, {transform_indices = @transform_1, window_bounds = array<i64: 2, 1>}]} {
    %c0_i32 = arith.constant 0 : i32
    %0 = arith.cmpi eq, %arg1, %c0_i32 : i32
    %1 = arith.extui %0 : i1 to i32
    %c0_i32_0 = arith.constant 0 : i32
    %2 = arith.cmpi ne, %1, %c0_i32_0 : i32
    scf.if %2 {
      %cst_14 = arith.constant 0xFF800000 : f32
      %26 = vector.broadcast %cst_14 : f32 to vector<2x1xf32>
      %c0_15 = arith.constant 0 : index
      %c0_16 = arith.constant 0 : index
      %27 = vector.load %arg4[%c0_15, %c0_16] : memref<2x1xf32, #tpu.memory_space<vmem>>, vector<2x1xf32>
      tpu.vector_store %arg4[%c0_15, %c0_16], %26 {strides = array<i32>} : memref<2x1xf32, #tpu.memory_space<vmem>>, vector<2x1xf32>,
      %c0_i32_17 = arith.constant 0 : i32
      %28 = vector.broadcast %c0_i32_17 : i32 to vector<2x1xi32>
      %c0_18 = arith.constant 0 : index
      %c0_19 = arith.constant 0 : index
      %29 = vector.load %arg5[%c0_18, %c0_19] : memref<2x1xi32, #tpu.memory_space<vmem>>, vector<2x1xi32>
      tpu.vector_store %arg5[%c0_18, %c0_19], %28 {strides = array<i32>} : memref<2x1xi32, #tpu.memory_space<vmem>>, vector<2x1xi32>,
    } else {
    }
    %c0 = arith.constant 0 : index
    %c0_1 = arith.constant 0 : index
    %3 = vector.load %arg2[%c0, %c0_1] : memref<2x16xf32, #tpu.memory_space<vmem>>, vector<2x16xf32>
    %4 = tpu.iota {dimensions = array<i32: 1>} : vector<2x16xi32>
    %cst = arith.constant dense<0xFF800000> : vector<2xf32>
    %5 = vector.multi_reduction <maximumf>, %3, %cst [1] : vector<2x16xf32> to vector<2xf32>
    %6 = vector.shape_cast %5 : vector<2xf32> to vector<2x1xf32>
    %7 = vector.broadcast %6 : vector<2x1xf32> to vector<2x16xf32>
    %8 = arith.cmpf oeq, %3, %7 : vector<2x16xf32>
    %c16_i32 = arith.constant 16 : i32
    %9 = vector.broadcast %c16_i32 : i32 to vector<2x16xi32>
    %10 = arith.select %8, %4, %9 : vector<2x16xi1>, vector<2x16xi32>
    %cst_2 = arith.constant dense<2147483647> : vector<2xi32>
    %11 = vector.multi_reduction <minsi>, %10, %cst_2 [1] : vector<2x16xi32> to vector<2xi32>
    %12 = vector.shape_cast %11 : vector<2xi32> to vector<2x1xi32>
    %c16_i32_3 = arith.constant 16 : i32
    %13 = arith.muli %arg1, %c16_i32_3 : i32
    %14 = vector.broadcast %13 : i32 to vector<2x1xi32>
    %15 = arith.addi %12, %14 : vector<2x1xi32>
    %c0_4 = arith.constant 0 : index
    %c0_5 = arith.constant 0 : index
    %16 = vector.load %arg4[%c0_4, %c0_5] : memref<2x1xf32, #tpu.memory_space<vmem>>, vector<2x1xf32>
    %17 = arith.cmpf ogt, %6, %16 : vector<2x1xf32>
    %18 = arith.select %17, %6, %16 : vector<2x1xi1>, vector<2x1xf32>
    %c0_6 = arith.constant 0 : index
    %c0_7 = arith.constant 0 : index
    %19 = vector.load %arg4[%c0_6, %c0_7] : memref<2x1xf32, #tpu.memory_space<vmem>>, vector<2x1xf32>
    tpu.vector_store %arg4[%c0_6, %c0_7], %18 {strides = array<i32>} : memref<2x1xf32, #tpu.memory_space<vmem>>, vector<2x1xf32>,
    %c0_8 = arith.constant 0 : index
    %c0_9 = arith.constant 0 : index
    %20 = vector.load %arg5[%c0_8, %c0_9] : memref<2x1xi32, #tpu.memory_space<vmem>>, vector<2x1xi32>
    %21 = arith.select %17, %15, %20 : vector<2x1xi1>, vector<2x1xi32>
    %c0_10 = arith.constant 0 : index
    %c0_11 = arith.constant 0 : index
    %22 = vector.load %arg5[%c0_10, %c0_11] : memref<2x1xi32, #tpu.memory_space<vmem>>, vector<2x1xi32>
    tpu.vector_store %arg5[%c0_10, %c0_11], %21 {strides = array<i32>} : memref<2x1xi32, #tpu.memory_space<vmem>>, vector<2x1xi32>,
    %c0_i32_12 = arith.constant 0 : i32
    %23 = arith.cmpi eq, %arg1, %c0_i32_12 : i32
    %24 = arith.extui %23 : i1 to i32
    %c0_i32_13 = arith.constant 0 : i32
    %25 = arith.cmpi ne, %24, %c0_i32_13 : i32
    scf.if %25 {
      %c0_14 = arith.constant 0 : index
      %c0_15 = arith.constant 0 : index
      %26 = vector.load %arg5[%c0_14, %c0_15] : memref<2x1xi32, #tpu.memory_space<vmem>>, vector<2x1xi32>
      %c0_16 = arith.constant 0 : index
      %c0_17 = arith.constant 0 : index
      %27 = vector.load %arg3[%c0_16, %c0_17] : memref<2x1xi32, #tpu.memory_space<vmem>>, vector<2x1xi32>
      tpu.vector_store %arg3[%c0_16, %c0_17], %26 {strides = array<i32>} : memref<2x1xi32, #tpu.memory_space<vmem>>, vector<2x1xi32>,
    } else {
    }
    return
  }
  func.func @transform_0(%arg0: i32, %arg1: i32) -> (i32, i32) {
    %c0_i32 = arith.constant 0 : i32
    return %arg0, %arg1 : i32, i32
  }
  func.func @transform_1(%arg0: i32, %arg1: i32) -> (i32, i32) {
    %c0_i32 = arith.constant 0 : i32
    %c0_i32_0 = arith.constant 0 : i32
    return %arg0, %c0_i32 : i32, i32
  }
}

</mosaic_0001>

<llo_original>
// kernel: tpu_custom_call.1
$region0: #{tpu_custom_call.1}
  #allocation0 [shape = 'u32[]', space=smem, size = 0x4, offset = 0x4, fixed_abs, tag = 'smem constant byte address 0x4 - core index']
  #allocation1 [shape = 'u32[144,128]{1,0:T(1,128)}', space=vmem, size = 0x12000, scoped, tag = 'internal scratch']
  #allocation2 [shape = 'f32[2,1]{1,0:T(2,128)}', space=vmem, size = 0x400, scoped, tag = 'scratch operand']
  #allocation3 [shape = 's32[2,1]{1,0:T(2,128)}', space=vmem, size = 0x400, scoped, tag = 'scratch operand']
  %s0 = inlined_call_operand.hbm [shape: f32[2,16], index: 0, kind: input, shape index: {}]
  %s1 = inlined_call_operand.vmem [shape: s32[2,1], index: 1, kind: output, shape index: {}]
  %s2 = sld [smem:[#allocation0]]
  $region26: #{tpu_custom_call.1} parent=0
    _
  %s4 = ssub.s32 1, %s2
  %s5 = scalar_select 0, %s4, %s2
  $region1: #{tpu_custom_call.1} parent=0
    #allocation4 [shape = 'u8[1024]{0}', space=vmem, size = 0x400, scoped, tag = 'input window, operand 0, single buffered']
    #allocation5 [shape = 's32[1]{0}', space=sflag, size = 0x4, scoped, tag = 'scoped memory for tpu_custom_call.1']
    %6 = vsyncpa [#allocation5], 0
    // Predicated region
    $region2: #{tpu_custom_call.1} parent=1 // pred_check
      _
    $region3: #{tpu_custom_call.1} parent=1 // pred_check_branch
      %8 = sbr.rel (0) target = $region5
    $region4: #{tpu_custom_call.1} parent=1 // pred_region
      %s10 = ssub.s32 32, 32
      %11 = vsyncadd [#allocation5], %s10
      %s13 = sshll.u32 [#allocation4], 4
      %s14 = int_to_ptr.vmem [resolvable:$true] %s13
      %16 = dma.hbm_to_vmem [thread:$0]  %s0, 32, %s14, [#allocation5]
    $region5: #{tpu_custom_call.1} parent=1 // pred_fallthru
      _
    // Predicated region
    $region6: #{tpu_custom_call.1} parent=1 // pred_check
      _
    $region7: #{tpu_custom_call.1} parent=1 // pred_check_branch
      %18 = sbr.rel (0) target = $region9
    $region8: #{tpu_custom_call.1} parent=1 // pred_region
      %19 = dma.done [#allocation5], 32
    $region9: #{tpu_custom_call.1} parent=1 // pred_fallthru
      _
    %p20 = scmp.eq.s32.totalorder 0, 0
    // Predicated region
    $region10: #{tpu_custom_call.1} parent=1 // pred_check
      %p21 = pneg %p20
    $region11: #{tpu_custom_call.1} parent=1 // pred_check_branch
      %23 = sbr.rel (%p21) target = $region13
    $region12: #{tpu_custom_call.1} parent=1 // pred_region
      %vm24 = vcmask 1024
      %25 = vst.msk [vmem:[#allocation2] sm:$0x3] %vm24, -inf
      %26 = vst.msk [vmem:[#allocation3] sm:$0x3] %vm24, 0
    $region13: #{tpu_custom_call.1} parent=1 // pred_fallthru
      _
    %v27 = vld [vmem:[#allocation4] sm:$0x3]
    %v28 = vlaneseq
    %v29 = vand.u32 %v28, 127
    %vm30 = vcmask 123904
    %v31 = vsel %vm30, %v27, -inf
    %32 = vmax.xlane.f32.xlu0 %v31
    %v33 = vpop.xlane.xlu0 %32
    %vm34 = vcmp.eq.f32.partialorder %v27, %v33
    %v35 = vsel %vm34, %v29, 16
    %v36 = vsel %vm30, %v35, 2147483647
    %v37 = vand.u32 %v36, 65535
    %v38 = vshra.s32 %v36, 16
    %v39 = vcvt.s32.f32 %v37
    %v40 = vcvt.s32.f32 %v38
    %41 = vmin.xlane.f32.xlu0 %v40
    %v42 = vpop.xlane.xlu0 %41
    %vm43 = vcmp.eq.f32.partialorder %v40, %v42
    %v44 = vsel %vm43, %v39, inf
    %45 = vmin.xlane.f32.xlu0 %v44
    %v46 = vpop.xlane.xlu0 %45
    %v47 = vcvt.f32.s32 %v46
    %v48 = vcvt.f32.s32 %v42
    %v49 = vshll.u32 %v48, 16
    %v50 = vadd.s32 %v49, %v47
    %s51 = smul.u32 0, 16
    %v52 = vstv %s51
    %v53 = vadd.s32 %v50, %v52
    %v54 = vld [vmem:[#allocation2] sm:$0x3]
    %vm55 = vcmp.gt.f32.partialorder %v33, %v54
    %v56 = vsel %vm55, %v33, %v54
    %vm57 = vcmask 1024
    %58 = vst.msk [vmem:[#allocation2] sm:$0x3] %vm57, %v56
    %v59 = vld [vmem:[#allocation3] sm:$0x3]
    %v60 = vsel %vm55, %v53, %v59
    %61 = vst.msk [vmem:[#allocation3] sm:$0x3] %vm57, %v60
    // Predicated region
    $region14: #{tpu_custom_call.1} parent=1 // pred_check
      %p62 = pneg %p20
    $region15: #{tpu_custom_call.1} parent=1 // pred_check_branch
      %64 = sbr.rel (%p62) target = $region17
    $region16: #{tpu_custom_call.1} parent=1 // pred_region
      %v65 = vld [vmem:[#allocation3] sm:$0x3]
      %66 = vst.msk [vmem:[%s1] sm:$0x3] %vm57, %v65
    $region17: #{tpu_custom_call.1} parent=1 // pred_fallthru
      _
    // Predicated region
    $region18: #{tpu_custom_call.1} parent=1 // pred_check
      _
    $region19: #{tpu_custom_call.1} parent=1 // pred_check_branch
      %68 = sbr.rel (0) target = $region21
    $region20: #{tpu_custom_call.1} parent=1 // pred_region
      _
    $region21: #{tpu_custom_call.1} parent=1 // pred_fallthru
      _
    // Predicated region
    $region22: #{tpu_custom_call.1} parent=1 // pred_check
      _
    $region23: #{tpu_custom_call.1} parent=1 // pred_check_branch
      %70 = sbr.rel (0) target = $region25
    $region24: #{tpu_custom_call.1} parent=1 // pred_region
      _
    $region25: #{tpu_custom_call.1} parent=1 // pred_fallthru
      _
    %71 = vsyncpa [#allocation5], 1

</llo_original>
